<compile_context>
chip_gen: v7x
topology: tpu7x:2x2x1
jax: 0.10.0
libtpu: 0.0.40
codegen_flags: <defaults>
</compile_context>

<pallas_src>
import jax
import jax.numpy as jnp
from jax import lax
from jax.experimental import pallas as pl
from jax.experimental.pallas import tpu as pltpu

BN_EPS = 1e-5
# bf16 MXU path on v6e/v7x (f32 accumulation is kept for the GEMMs and all BN stats).
MXU_DTYPE = jnp.bfloat16


def _make_kernel(N, H, W, Cin, Cout):
    NH = N * H
    WCin, WCout = W * Cin, W * Cout

    def im2col(x3, wc):
        # x3: (N, H, wc) f32 -> (N*H, 3*wc): the three circular H taps
        # (rows h-1, h, h+1 mod H) laid out along K.  pltpu.roll is a sublane
        # rotate on the XLU, applied per batch element so there is no wrap across
        # the batch axis and no padded scratch / unaligned-sublane slice copies.
        rows = []
        for n in range(N):
            xn = x3[n]                                              # (H, wc)
            taps = [xn if dh == 1 else pltpu.roll(xn, (1 - dh) % H, 0)
                    for dh in range(3)]           # tap dh reads x[(h + dh - 1) % H]
            rows.append(jnp.concatenate(taps, axis=-1))             # (H, 3*wc)
        return jnp.concatenate(rows, axis=0)                        # (N*H, 3*wc)

    def conv(x3, m_ref, wc):
        # One deep GEMM per conv: K = 3*wc folds the 3 kh taps, the 3 kw taps AND
        # the circular W padding (block-circulant weights) into the contraction.
        lhs = im2col(x3, wc).astype(MXU_DTYPE)                      # (NH, 3*wc) bf16
        return jnp.dot(lhs, m_ref[...],
                       preferred_element_type=jnp.float32)          # (NH, WCout) f32

    def bn_relu(act, a_ref, g_ref, be_ref):
        # One-pass training-mode BatchNorm2d + ReLU, statistics in f32.
        # a_ref: (WCout, WCout) with A[j,k] = [j%Cout == k%Cout] / (N*H*W); a single
        # (2,WC)x(WC,WC) matmul reduces the W blocks of the lane dim for BOTH the
        # sum and sum-of-squares and re-broadcasts per-channel stats to every lane.
        s = jnp.concatenate(
            [jnp.sum(act, axis=0, keepdims=True),
             jnp.sum(act * act, axis=0, keepdims=True)], axis=0)    # (2, WCout)
        stats = jnp.dot(s, a_ref[...], preferred_element_type=jnp.float32)
        mean, ex2 = stats[0:1, :], stats[1:2, :]
        var = ex2 - mean * mean                                     # biased batch var
        scale = lax.rsqrt(var + BN_EPS) * g_ref[...]
        return jnp.maximum((act - mean) * scale + be_ref[...], 0.0)

    def kernel(x_ref, m1_ref, m2_ref, a_ref, g1_ref, be1_ref, g2_ref, be2_ref,
               o_ref):
        # conv1 (+bias folded into BN) -> bn1 -> relu
        y = bn_relu(conv(x_ref[...], m1_ref, WCin), a_ref, g1_ref, be1_ref)
        # conv2 -> bn2 -> relu
        z = bn_relu(conv(y.reshape(N, H, WCout), m2_ref, WCout),
                    a_ref, g2_ref, be2_ref)
        o_ref[...] = z.reshape(N, H, WCout)

    return kernel


def _circulant_weights(wgt, W):
    # wgt: (3, 3, cin, cout) -> (3*W*cin, W*cout).  The kh taps are stacked along K
    # (matching the im2col layout); each (W*cin, W*cout) block is block-circulant,
    # folding the 3 kw taps and the circular W padding into the contraction:
    #   M[dh*W*cin + w'*cin + c, w*cout + o] = wgt[dh, dw, c, o]  iff  w' == (w+dw-1) % W.
    _, _, cin, cout = wgt.shape
    eye = jnp.eye(W, dtype=jnp.float32)
    mats = []
    for dh in range(3):
        m = jnp.zeros((W, cin, W, cout), jnp.float32)
        for dw in range(3):
            shift = jnp.roll(eye, dw - 1, axis=0)   # S[w', w] = [w' == (w+dw-1) % W]
            m = m + jnp.einsum("vw,co->vcwo", shift, wgt[dh, dw].astype(jnp.float32))
        mats.append(m.reshape(W * cin, W * cout))
    return jnp.concatenate(mats, axis=0).astype(MXU_DTYPE)


def conv_block_pallas(x_nchw, params):
    """Forward of conv_block. x_nchw: (N, Cin, H, W) f32 -> (N, Cout, H, W) f32."""
    # TODO(synk): when chaining conv_blocks, keep activations in the lane-dense
    # (N, H, W*C) layout across blocks instead of paying NCHW<->NHWC transposes
    # (full-tensor HBM round trips) on every call.
    x = jnp.transpose(x_nchw, (0, 2, 3, 1)).astype(jnp.float32)     # NHWC
    N, H, W, Cin = x.shape
    Cout = params["w1"].shape[-1]
    assert H >= 3 and W >= 3
    WCin, WCout = W * Cin, W * Cout
    # The block-circulant-over-W trick only pays while W*C is small: its zero
    # padding costs ~W/3 redundant MXU flops and m2 grows as 3*(W*Cout)^2.
    # TODO(synk): at production widths switch to a (N*H*W, C)-layout im2col kernel.
    assert max(WCin, WCout) <= 512, "W*C too large for the circulant-weight kernel"

    x_flat = x.reshape(N, H, WCin)
    m1 = _circulant_weights(params["w1"], W)       # (3*W*Cin,  W*Cout) bf16
    m2 = _circulant_weights(params["w2"], W)       # (3*W*Cout, W*Cout) bf16
    # channel-sum / re-broadcast matrix for BN statistics, pre-scaled by 1/(N*H*W)
    a = jnp.tile(jnp.eye(Cout, dtype=jnp.float32), (W, W)) / float(N * H * W)

    def tile_c(v):   # per-channel (Cout,) -> lane layout (1, W*Cout)
        return jnp.tile(v.astype(jnp.float32), W).reshape(1, WCout)

    # NOTE: conv biases b1/b2 are intentionally NOT passed to the kernel: a
    # per-channel bias immediately followed by training-mode BN mean subtraction
    # cancels exactly (the f32 reference below keeps them; results match).

    kernel = _make_kernel(N, H, W, Cin, Cout)
    vmem = pl.BlockSpec(memory_space=pltpu.MemorySpace.VMEM)

    out = pl.pallas_call(
        kernel,
        out_shape=jax.ShapeDtypeStruct((N, H, WCout), jnp.float32),
        in_specs=[vmem] * 8,
        out_specs=vmem,
    )(x_flat, m1, m2, a,
      tile_c(params["g1"]), tile_c(params["be1"]),
      tile_c(params["g2"]), tile_c(params["be2"]))

    # TODO(synk): at production UNet shapes, add a grid over N / H row-bands
    # (weights with a constant index_map so they stay VMEM-resident while the
    # activation blocks pipeline, BN sums accumulated across steps and finalized
    # under pl.when) so the working set fits v7x's 64 MiB VMEM and its two
    # TensorCores get 'parallel' axes.  At this test shape the whole problem is
    # <0.5 MB, so a single block is fastest.
    return jnp.transpose(out.reshape(N, H, W, Cout), (0, 3, 1, 2))


# ----------------------------- pure-JAX reference -----------------------------
def conv_block_ref(x_nchw, params):
    x = jnp.transpose(x_nchw, (0, 2, 3, 1)).astype(jnp.float32)
    N, H, W, _ = x.shape

    def conv(x, w, b):
        xp = jnp.pad(x, ((0, 0), (1, 1), (1, 1), (0, 0)), mode="wrap")
        out = b.reshape(1, 1, 1, -1)
        for dh in range(3):
            for dw in range(3):
                out = out + jnp.einsum("nhwc,co->nhwo",
                                       xp[:, dh:dh + H, dw:dw + W, :], w[dh, dw])
        return out

    def bn_relu(x, g, b):
        mean = jnp.mean(x, axis=(0, 1, 2), keepdims=True)
        var = jnp.mean((x - mean) ** 2, axis=(0, 1, 2), keepdims=True)
        y = (x - mean) * lax.rsqrt(var + BN_EPS) * g + b
        return jnp.maximum(y, 0.0)

    y = bn_relu(conv(x, params["w1"], params["b1"]), params["g1"], params["be1"])
    y = bn_relu(conv(y, params["w2"], params["b2"]), params["g2"], params["be2"])
    return jnp.transpose(y, (0, 3, 1, 2))


def init_params(key, in_c, out_c):
    ks = jax.random.split(key, 4)
    k1 = 1.0 / jnp.sqrt(in_c * 9.0)
    k2 = 1.0 / jnp.sqrt(out_c * 9.0)
    return {
        # (kh, kw, Cin, Cout) layout (= PyTorch (Cout,Cin,kh,kw).transpose(2,3,1,0))
        "w1": jax.random.uniform(ks[0], (3, 3, in_c, out_c), jnp.float32, -k1, k1),
        "b1": jax.random.uniform(ks[1], (out_c,), jnp.float32, -k1, k1),
        "g1": jnp.ones((out_c,), jnp.float32),    # BatchNorm weight init (PyTorch)
        "be1": jnp.zeros((out_c,), jnp.float32),  # BatchNorm bias init (PyTorch)
        "w2": jax.random.uniform(ks[2], (3, 3, out_c, out_c), jnp.float32, -k2, k2),
        "b2": jax.random.uniform(ks[3], (out_c,), jnp.float32, -k2, k2),
        "g2": jnp.ones((out_c,), jnp.float32),
        "be2": jnp.zeros((out_c,), jnp.float32),
    }
    # TODO(synk): BatchNorm running_mean/running_var buffer updates (a training
    # side effect) are not modeled; forward uses batch statistics exactly as
    # PyTorch training-mode forward does.


if __name__ == "__main__":
    N, in_c, out_c, H, W = 2, 4, 8, 16, 16
    key = jax.random.PRNGKey(0)
    kx, kp = jax.random.split(key)
    x = jax.random.normal(kx, (N, in_c, H, W), jnp.float32)
    params = init_params(kp, in_c, out_c)

    out = jax.block_until_ready(conv_block_pallas(x, params))
    ref = jax.block_until_ready(conv_block_ref(x, params))

    assert out.shape == (N, out_c, H, W), out.shape
    # Tolerance widened vs the pure-f32 reference because the GEMM operands are
    # bf16 on the MXU (accumulation is f32); structural errors would still be O(1).
    err = float(jnp.max(jnp.abs(out - ref)))
    assert jnp.allclose(out, ref, atol=3e-2, rtol=2e-2), f"max abs err = {err}"
    print("KERNEL_OK")
</pallas_src>

<mosaic_0001>
module attributes {stable_mosaic.version = 11 : i64} {
  func.func @kernel(%arg0: memref<2x16x64xf32, #tpu.memory_space<vmem>>, %arg1: memref<192x128xbf16, #tpu.memory_space<vmem>>, %arg2: memref<384x128xbf16, #tpu.memory_space<vmem>>, %arg3: memref<128x128xf32, #tpu.memory_space<vmem>>, %arg4: memref<1x128xf32, #tpu.memory_space<vmem>>, %arg5: memref<1x128xf32, #tpu.memory_space<vmem>>, %arg6: memref<1x128xf32, #tpu.memory_space<vmem>>, %arg7: memref<1x128xf32, #tpu.memory_space<vmem>>, %arg8: memref<2x16x128xf32, #tpu.memory_space<vmem>>) attributes {dimension_semantics = [], scalar_prefetch = 0 : i64, scratch_operands = 0 : i64, tpu.core_type = #tpu.core_type<tc>} {
    %c0 = arith.constant 0 : index
    %c0_0 = arith.constant 0 : index
    %c0_1 = arith.constant 0 : index
    %0 = vector.load %arg0[%c0, %c0_0, %c0_1] : memref<2x16x64xf32, #tpu.memory_space<vmem>>, vector<2x16x64xf32>
    %1 = vector.extract_strided_slice %0 {offsets = [0, 0, 0], sizes = [1, 16, 64], strides = [1, 1, 1]} : vector<2x16x64xf32> to vector<1x16x64xf32>
    %2 = vector.shape_cast %1 : vector<1x16x64xf32> to vector<16x64xf32>
    %c1_i32 = arith.constant 1 : i32
    %3 = tpu.dynamic_rotate %2 by %c1_i32 dim 0 : vector<16x64xf32>, i32 -> vector<16x64xf32>
    %c15_i32 = arith.constant 15 : i32
    %4 = tpu.dynamic_rotate %2 by %c15_i32 dim 0 : vector<16x64xf32>, i32 -> vector<16x64xf32>
    %5 = tpu.concatenate %3, %2, %4 in 1 : vector<16x64xf32>, vector<16x64xf32>, vector<16x64xf32> -> vector<16x192xf32>
    %6 = vector.extract_strided_slice %0 {offsets = [1, 0, 0], sizes = [1, 16, 64], strides = [1, 1, 1]} : vector<2x16x64xf32> to vector<1x16x64xf32>
    %7 = vector.shape_cast %6 : vector<1x16x64xf32> to vector<16x64xf32>
    %c1_i32_2 = arith.constant 1 : i32
    %8 = tpu.dynamic_rotate %7 by %c1_i32_2 dim 0 : vector<16x64xf32>, i32 -> vector<16x64xf32>
    %c15_i32_3 = arith.constant 15 : i32
    %9 = tpu.dynamic_rotate %7 by %c15_i32_3 dim 0 : vector<16x64xf32>, i32 -> vector<16x64xf32>
    %10 = tpu.concatenate %8, %7, %9 in 1 : vector<16x64xf32>, vector<16x64xf32>, vector<16x64xf32> -> vector<16x192xf32>
    %11 = tpu.concatenate %5, %10 in 0 : vector<16x192xf32>, vector<16x192xf32> -> vector<32x192xf32>
    %12 = arith.truncf %11 : vector<32x192xf32> to vector<32x192xbf16>
    %c0_4 = arith.constant 0 : index
    %c0_5 = arith.constant 0 : index
    %13 = vector.load %arg1[%c0_4, %c0_5] : memref<192x128xbf16, #tpu.memory_space<vmem>>, vector<192x128xbf16>
    %cst = arith.constant dense<0.000000e+00> : vector<32x128xf32>
    %14 = tpu.matmul %12, %13, %cst {dimension_numbers = #tpu.dot_dimension_numbers<[1], [0], [0], [1], [0, 0, 1, 1], [], []>} : vector<32x192xbf16>, vector<192x128xbf16>, vector<32x128xf32> -> vector<32x128xf32>
    %cst_6 = arith.constant dense<0.000000e+00> : vector<128xf32>
    %15 = vector.multi_reduction <add>, %14, %cst_6 [0] : vector<32x128xf32> to vector<128xf32>
    %16 = vector.shape_cast %15 : vector<128xf32> to vector<1x128xf32>
    %17 = arith.mulf %14, %14 : vector<32x128xf32>
    %cst_7 = arith.constant dense<0.000000e+00> : vector<128xf32>
    %18 = vector.multi_reduction <add>, %17, %cst_7 [0] : vector<32x128xf32> to vector<128xf32>
    %19 = vector.shape_cast %18 : vector<128xf32> to vector<1x128xf32>
    %20 = tpu.concatenate %16, %19 in 0 : vector<1x128xf32>, vector<1x128xf32> -> vector<2x128xf32>
    %c0_8 = arith.constant 0 : index
    %c0_9 = arith.constant 0 : index
    %21 = vector.load %arg3[%c0_8, %c0_9] : memref<128x128xf32, #tpu.memory_space<vmem>>, vector<128x128xf32>
    %cst_10 = arith.constant dense<0.000000e+00> : vector<2x128xf32>
    %22 = tpu.matmul %20, %21, %cst_10 {dimension_numbers = #tpu.dot_dimension_numbers<[1], [0], [0], [1], [0, 0, 1, 1], [], []>} : vector<2x128xf32>, vector<128x128xf32>, vector<2x128xf32> -> vector<2x128xf32>
    %23 = vector.extract_strided_slice %22 {offsets = [0, 0], sizes = [1, 128], strides = [1, 1]} : vector<2x128xf32> to vector<1x128xf32>
    %24 = vector.extract_strided_slice %22 {offsets = [1, 0], sizes = [1, 128], strides = [1, 1]} : vector<2x128xf32> to vector<1x128xf32>
    %25 = arith.mulf %23, %23 : vector<1x128xf32>
    %26 = arith.subf %24, %25 : vector<1x128xf32>
    %cst_11 = arith.constant 9.99999974E-6 : f32
    %27 = vector.broadcast %cst_11 : f32 to vector<1x128xf32>
    %28 = arith.addf %26, %27 : vector<1x128xf32>
    %29 = math.rsqrt %28 : vector<1x128xf32>
    %c0_12 = arith.constant 0 : index
    %c0_13 = arith.constant 0 : index
    %30 = vector.load %arg4[%c0_12, %c0_13] : memref<1x128xf32, #tpu.memory_space<vmem>>, vector<1x128xf32>
    %31 = arith.mulf %29, %30 : vector<1x128xf32>
    %32 = vector.broadcast %23 : vector<1x128xf32> to vector<32x128xf32>
    %33 = arith.subf %14, %32 : vector<32x128xf32>
    %34 = vector.broadcast %31 : vector<1x128xf32> to vector<32x128xf32>
    %35 = arith.mulf %33, %34 : vector<32x128xf32>
    %c0_14 = arith.constant 0 : index
    %c0_15 = arith.constant 0 : index
    %36 = vector.load %arg5[%c0_14, %c0_15] : memref<1x128xf32, #tpu.memory_space<vmem>>, vector<1x128xf32>
    %37 = vector.broadcast %36 : vector<1x128xf32> to vector<32x128xf32>
    %38 = arith.addf %35, %37 : vector<32x128xf32>
    %cst_16 = arith.constant 0.000000e+00 : f32
    %39 = vector.broadcast %cst_16 : f32 to vector<32x128xf32>
    %40 = arith.maximumf %38, %39 : vector<32x128xf32>
    %41 = vector.shape_cast %40 : vector<32x128xf32> to vector<2x16x128xf32>
    %42 = vector.extract_strided_slice %41 {offsets = [0, 0, 0], sizes = [1, 16, 128], strides = [1, 1, 1]} : vector<2x16x128xf32> to vector<1x16x128xf32>
    %43 = vector.shape_cast %42 : vector<1x16x128xf32> to vector<16x128xf32>
    %c1_i32_17 = arith.constant 1 : i32
    %44 = tpu.dynamic_rotate %43 by %c1_i32_17 dim 0 : vector<16x128xf32>, i32 -> vector<16x128xf32>
    %c15_i32_18 = arith.constant 15 : i32
    %45 = tpu.dynamic_rotate %43 by %c15_i32_18 dim 0 : vector<16x128xf32>, i32 -> vector<16x128xf32>
    %46 = tpu.concatenate %44, %43, %45 in 1 : vector<16x128xf32>, vector<16x128xf32>, vector<16x128xf32> -> vector<16x384xf32>
    %47 = vector.extract_strided_slice %41 {offsets = [1, 0, 0], sizes = [1, 16, 128], strides = [1, 1, 1]} : vector<2x16x128xf32> to vector<1x16x128xf32>
    %48 = vector.shape_cast %47 : vector<1x16x128xf32> to vector<16x128xf32>
    %c1_i32_19 = arith.constant 1 : i32
    %49 = tpu.dynamic_rotate %48 by %c1_i32_19 dim 0 : vector<16x128xf32>, i32 -> vector<16x128xf32>
    %c15_i32_20 = arith.constant 15 : i32
    %50 = tpu.dynamic_rotate %48 by %c15_i32_20 dim 0 : vector<16x128xf32>, i32 -> vector<16x128xf32>
    %51 = tpu.concatenate %49, %48, %50 in 1 : vector<16x128xf32>, vector<16x128xf32>, vector<16x128xf32> -> vector<16x384xf32>
    %52 = tpu.concatenate %46, %51 in 0 : vector<16x384xf32>, vector<16x384xf32> -> vector<32x384xf32>
    %53 = arith.truncf %52 : vector<32x384xf32> to vector<32x384xbf16>
    %c0_21 = arith.constant 0 : index
    %c0_22 = arith.constant 0 : index
    %54 = vector.load %arg2[%c0_21, %c0_22] : memref<384x128xbf16, #tpu.memory_space<vmem>>, vector<384x128xbf16>
    %cst_23 = arith.constant dense<0.000000e+00> : vector<32x128xf32>
    %55 = tpu.matmul %53, %54, %cst_23 {dimension_numbers = #tpu.dot_dimension_numbers<[1], [0], [0], [1], [0, 0, 1, 1], [], []>} : vector<32x384xbf16>, vector<384x128xbf16>, vector<32x128xf32> -> vector<32x128xf32>
    %cst_24 = arith.constant dense<0.000000e+00> : vector<128xf32>
    %56 = vector.multi_reduction <add>, %55, %cst_24 [0] : vector<32x128xf32> to vector<128xf32>
    %57 = vector.shape_cast %56 : vector<128xf32> to vector<1x128xf32>
    %58 = arith.mulf %55, %55 : vector<32x128xf32>
    %cst_25 = arith.constant dense<0.000000e+00> : vector<128xf32>
    %59 = vector.multi_reduction <add>, %58, %cst_25 [0] : vector<32x128xf32> to vector<128xf32>
    %60 = vector.shape_cast %59 : vector<128xf32> to vector<1x128xf32>
    %61 = tpu.concatenate %57, %60 in 0 : vector<1x128xf32>, vector<1x128xf32> -> vector<2x128xf32>
    %c0_26 = arith.constant 0 : index
    %c0_27 = arith.constant 0 : index
    %62 = vector.load %arg3[%c0_26, %c0_27] : memref<128x128xf32, #tpu.memory_space<vmem>>, vector<128x128xf32>
    %cst_28 = arith.constant dense<0.000000e+00> : vector<2x128xf32>
    %63 = tpu.matmul %61, %62, %cst_28 {dimension_numbers = #tpu.dot_dimension_numbers<[1], [0], [0], [1], [0, 0, 1, 1], [], []>} : vector<2x128xf32>, vector<128x128xf32>, vector<2x128xf32> -> vector<2x128xf32>
    %64 = vector.extract_strided_slice %63 {offsets = [0, 0], sizes = [1, 128], strides = [1, 1]} : vector<2x128xf32> to vector<1x128xf32>
    %65 = vector.extract_strided_slice %63 {offsets = [1, 0], sizes = [1, 128], strides = [1, 1]} : vector<2x128xf32> to vector<1x128xf32>
    %66 = arith.mulf %64, %64 : vector<1x128xf32>
    %67 = arith.subf %65, %66 : vector<1x128xf32>
    %cst_29 = arith.constant 9.99999974E-6 : f32
    %68 = vector.broadcast %cst_29 : f32 to vector<1x128xf32>
    %69 = arith.addf %67, %68 : vector<1x128xf32>
    %70 = math.rsqrt %69 : vector<1x128xf32>
    %c0_30 = arith.constant 0 : index
    %c0_31 = arith.constant 0 : index
    %71 = vector.load %arg6[%c0_30, %c0_31] : memref<1x128xf32, #tpu.memory_space<vmem>>, vector<1x128xf32>
    %72 = arith.mulf %70, %71 : vector<1x128xf32>
    %73 = vector.broadcast %64 : vector<1x128xf32> to vector<32x128xf32>
    %74 = arith.subf %55, %73 : vector<32x128xf32>
    %75 = vector.broadcast %72 : vector<1x128xf32> to vector<32x128xf32>
    %76 = arith.mulf %74, %75 : vector<32x128xf32>
    %c0_32 = arith.constant 0 : index
    %c0_33 = arith.constant 0 : index
    %77 = vector.load %arg7[%c0_32, %c0_33] : memref<1x128xf32, #tpu.memory_space<vmem>>, vector<1x128xf32>
    %78 = vector.broadcast %77 : vector<1x128xf32> to vector<32x128xf32>
    %79 = arith.addf %76, %78 : vector<32x128xf32>
    %cst_34 = arith.constant 0.000000e+00 : f32
    %80 = vector.broadcast %cst_34 : f32 to vector<32x128xf32>
    %81 = arith.maximumf %79, %80 : vector<32x128xf32>
    %82 = vector.shape_cast %81 : vector<32x128xf32> to vector<2x16x128xf32>
    %c0_35 = arith.constant 0 : index
    %c0_36 = arith.constant 0 : index
    %c0_37 = arith.constant 0 : index
    %83 = vector.load %arg8[%c0_35, %c0_36, %c0_37] : memref<2x16x128xf32, #tpu.memory_space<vmem>>, vector<2x16x128xf32>
    tpu.vector_store %arg8[%c0_35, %c0_36, %c0_37], %82 {strides = array<i32>} : memref<2x16x128xf32, #tpu.memory_space<vmem>>, vector<2x16x128xf32>,
    return
  }
}

</mosaic_0001>

<llo_original>
// kernel: tpu_custom_call.1
$region0: #{tpu_custom_call.1}
  #allocation0 [shape = 'u32[]', space=smem, size = 0x4, offset = 0x4, fixed_abs, tag = 'smem constant byte address 0x4 - core index']
  #allocation1 [shape = 'u32[144,128]{1,0:T(1,128)}', space=vmem, size = 0x12000, scoped, tag = 'internal scratch']
  %s0 = inlined_call_operand.hbm [shape: f32[2,16,64], index: 0, kind: input, shape index: {}]
  %s1 = inlined_call_operand.hbm [shape: bf16[192,128], index: 1, kind: input, shape index: {}]
  %s2 = inlined_call_operand.hbm [shape: bf16[384,128], index: 2, kind: input, shape index: {}]
  %s3 = inlined_call_operand.hbm [shape: f32[128,128], index: 3, kind: input, shape index: {}]
  %s4 = inlined_call_operand.vmem [shape: f32[1,128], index: 4, kind: input, shape index: {}]
  %s5 = inlined_call_operand.vmem [shape: f32[1,128], index: 5, kind: input, shape index: {}]
  %s6 = inlined_call_operand.vmem [shape: f32[1,128], index: 6, kind: input, shape index: {}]
  %s7 = inlined_call_operand.vmem [shape: f32[1,128], index: 7, kind: input, shape index: {}]
  %s8 = inlined_call_operand.hbm [shape: f32[2,16,128], index: 8, kind: output, shape index: {}]
  %s9 = sld [smem:[#allocation0]]
  $region58: #{tpu_custom_call.1} parent=0
    _
  %s11 = ssub.s32 1, %s9
  %s12 = scalar_select 0, %s11, %s9
  $region1: #{tpu_custom_call.1} parent=0
    #allocation2 [shape = 'u8[16384]{0}', space=vmem, size = 0x4000, scoped, tag = 'input window, operand 0, single buffered']
    #allocation3 [shape = 's32[1]{0}', space=sflag, size = 0x4, scoped, tag = 'scoped memory for tpu_custom_call.1']
    #allocation4 [shape = 's32[1]{0}', space=sflag, size = 0x4, scoped, tag = 'scoped memory for tpu_custom_call.1']
    #allocation5 [shape = 'u8[49152]{0}', space=vmem, size = 0xc000, scoped, tag = 'input window, operand 1, single buffered']
    #allocation6 [shape = 's32[1]{0}', space=sflag, size = 0x4, scoped, tag = 'scoped memory for tpu_custom_call.1']
    #allocation7 [shape = 'u8[98304]{0}', space=vmem, size = 0x18000, scoped, tag = 'input window, operand 2, single buffered']
    #allocation8 [shape = 'u8[65536]{0}', space=vmem, size = 0x10000, scoped, tag = 'input window, operand 3, single buffered']
    #allocation9 [shape = 's32[1]{0}', space=sflag, size = 0x4, scoped, tag = 'scoped memory for tpu_custom_call.1']
    #allocation10 [shape = 'u8[16384]{0}', space=vmem, size = 0x4000, scoped, tag = 'output window, operand 0, single buffered']
    %13 = vsyncpa [#allocation3], 0
    %14 = vsyncpa [#allocation6], 0
    %15 = vsyncpa [#allocation9], 0
    %16 = vsyncpa [#allocation4], 0
    // Predicated region
    $region2: #{tpu_custom_call.1} parent=1 // pred_check
      _
    $region3: #{tpu_custom_call.1} parent=1 // pred_check_branch
      %18 = sbr.rel (0) target = $region5
    $region4: #{tpu_custom_call.1} parent=1 // pred_region
      %s20 = ssub.s32 512, 512
      %21 = vsyncadd [#allocation3], %s20
      %s22 = sshll.u32 [#allocation2], 4
      %s23 = int_to_ptr.vmem [resolvable:$true] %s22
      %28 = dma.hbm_to_vmem [thread:$0]  %s0, 512, %s23, [#allocation3], 128, 128, 8
    $region5: #{tpu_custom_call.1} parent=1 // pred_fallthru
      _
    // Predicated region
    $region6: #{tpu_custom_call.1} parent=1 // pred_check
      _
    $region7: #{tpu_custom_call.1} parent=1 // pred_check_branch
      %30 = sbr.rel (0) target = $region9
    $region8: #{tpu_custom_call.1} parent=1 // pred_region
      %s32 = ssub.s32 1536, 1536
      %33 = vsyncadd [#allocation6], %s32
      %s34 = sshll.u32 [#allocation5], 4
      %s35 = int_to_ptr.vmem [resolvable:$true] %s34
      %40 = dma.hbm_to_vmem [thread:$0]  %s1, 1536, %s35, [#allocation6], 64, 64, 4
    $region9: #{tpu_custom_call.1} parent=1 // pred_fallthru
      _
    // Predicated region
    $region10: #{tpu_custom_call.1} parent=1 // pred_check
      _
    $region11: #{tpu_custom_call.1} parent=1 // pred_check_branch
      %42 = sbr.rel (0) target = $region13
    $region12: #{tpu_custom_call.1} parent=1 // pred_region
      %s44 = ssub.s32 3072, 3072
      %45 = vsyncadd [#allocation6], %s44
      %s46 = sshll.u32 [#allocation7], 4
      %s47 = int_to_ptr.vmem [resolvable:$true] %s46
      %52 = dma.hbm_to_vmem [thread:$0]  %s2, 3072, %s47, [#allocation6], 64, 64, 4
    $region13: #{tpu_custom_call.1} parent=1 // pred_fallthru
      _
    // Predicated region
    $region14: #{tpu_custom_call.1} parent=1 // pred_check
      _
    $region15: #{tpu_custom_call.1} parent=1 // pred_check_branch
      %54 = sbr.rel (0) target = $region17
    $region16: #{tpu_custom_call.1} parent=1 // pred_region
      %s56 = ssub.s32 2048, 2048
      %57 = vsyncadd [#allocation9], %s56
      %s58 = sshll.u32 [#allocation8], 4
      %s59 = int_to_ptr.vmem [resolvable:$true] %s58
      %64 = dma.hbm_to_vmem [thread:$0]  %s3, 2048, %s59, [#allocation9], 128, 128, 8
    $region17: #{tpu_custom_call.1} parent=1 // pred_fallthru
      _
    // Predicated region
    $region18: #{tpu_custom_call.1} parent=1 // pred_check
      _
    $region19: #{tpu_custom_call.1} parent=1 // pred_check_branch
      %66 = sbr.rel (0) target = $region21
    $region20: #{tpu_custom_call.1} parent=1 // pred_region
      _
    $region21: #{tpu_custom_call.1} parent=1 // pred_fallthru
      _
    // Predicated region
    $region22: #{tpu_custom_call.1} parent=1 // pred_check
      _
    $region23: #{tpu_custom_call.1} parent=1 // pred_check_branch
      %68 = sbr.rel (0) target = $region25
    $region24: #{tpu_custom_call.1} parent=1 // pred_region
      _
    $region25: #{tpu_custom_call.1} parent=1 // pred_fallthru
      _
    // Predicated region
    $region26: #{tpu_custom_call.1} parent=1 // pred_check
      _
    $region27: #{tpu_custom_call.1} parent=1 // pred_check_branch
      %70 = sbr.rel (0) target = $region29
    $region28: #{tpu_custom_call.1} parent=1 // pred_region
      _
    $region29: #{tpu_custom_call.1} parent=1 // pred_fallthru
      _
    // Predicated region
    $region30: #{tpu_custom_call.1} parent=1 // pred_check
      _
    $region31: #{tpu_custom_call.1} parent=1 // pred_check_branch
      %72 = sbr.rel (0) target = $region33
    $region32: #{tpu_custom_call.1} parent=1 // pred_region
      _
    $region33: #{tpu_custom_call.1} parent=1 // pred_fallthru
      _
    // Predicated region
    $region34: #{tpu_custom_call.1} parent=1 // pred_check
      _
    $region35: #{tpu_custom_call.1} parent=1 // pred_check_branch
      %74 = sbr.rel (0) target = $region37
    $region36: #{tpu_custom_call.1} parent=1 // pred_region
      %75 = dma.done [#allocation3], 512
    $region37: #{tpu_custom_call.1} parent=1 // pred_fallthru
      _
    // Predicated region
    $region38: #{tpu_custom_call.1} parent=1 // pred_check
      _
    $region39: #{tpu_custom_call.1} parent=1 // pred_check_branch
      %77 = sbr.rel (0) target = $region41
    $region40: #{tpu_custom_call.1} parent=1 // pred_region
      %78 = dma.done [#allocation6], 1536
    $region41: #{tpu_custom_call.1} parent=1 // pred_fallthru
      _
    // Predicated region
    $region42: #{tpu_custom_call.1} parent=1 // pred_check
      _
    $region43: #{tpu_custom_call.1} parent=1 // pred_check_branch
      %80 = sbr.rel (0) target = $region45
    $region44: #{tpu_custom_call.1} parent=1 // pred_region
      %81 = dma.done [#allocation6], 3072
    $region45: #{tpu_custom_call.1} parent=1 // pred_fallthru
      _
    // Predicated region
    $region46: #{tpu_custom_call.1} parent=1 // pred_check
      _
    $region47: #{tpu_custom_call.1} parent=1 // pred_check_branch
      %83 = sbr.rel (0) target = $region49
    $region48: #{tpu_custom_call.1} parent=1 // pred_region
      %84 = dma.done [#allocation9], 2048
    $region49: #{tpu_custom_call.1} parent=1 // pred_fallthru
      _
    %v86 = vld [vmem:[#allocation2] sm:$0xff]
    %v87 = vld [vmem:[#allocation2 + $0x8] sm:$0xff]
    %v88 = vld [vmem:[#allocation2 + $0x10] sm:$0xff]
    %v89 = vld [vmem:[#allocation2 + $0x18] sm:$0xff]
    %v90 = vrot.slane %v86, 7
    %v91 = vrot.slane %v87, 7
    %v92 = vlaneseq
    %v93 = vshrl.u32 %v92, 7
    %vm94 = vcmp.lt.s32.totalorder %v93, 1
    %v95 = vsel %vm94, %v90, %v91
    %v96 = vsel %vm94, %v91, %v90
    %v97 = vrot.slane %v86, 1
    %v98 = vrot.slane %v87, 1
    %vm99 = vcmp.lt.s32.totalorder %v93, 7
    %v100 = vsel %vm99, %v97, %v98
    %v101 = vsel %vm99, %v98, %v97
    %104 = vrot.lane.b32.xlu0 %v86, 64
    %v105 = vpop.permute.xlu0 %104
    %106 = vrot.lane.b32.xlu0 %v87, 64
    %v107 = vpop.permute.xlu0 %106
    %vm110 = vcmask 523264
    %v111 = vsel %vm110, %v96, %v105
    %v112 = vsel %vm110, %v95, %v107
    %v113 = vrot.slane %v88, 7
    %v114 = vrot.slane %v89, 7
    %v115 = vsel %vm94, %v113, %v114
    %v116 = vsel %vm94, %v114, %v113
    %v117 = vrot.slane %v88, 1
    %v118 = vrot.slane %v89, 1
    %v119 = vsel %vm99, %v117, %v118
    %v120 = vsel %vm99, %v118, %v117
    %123 = vrot.lane.b32.xlu0 %v88, 64
    %v124 = vpop.permute.xlu0 %123
    %125 = vrot.lane.b32.xlu0 %v89, 64
    %v126 = vpop.permute.xlu0 %125
    %v129 = vsel %vm110, %v116, %v124
    %v130 = vsel %vm110, %v115, %v126
    %v131 = vpack.c.bf16 %v112, %v111
    %v132 = vpack.c.bf16 %v101, %v100
    %v133 = vpack.c.bf16 %v130, %v129
    %v134 = vpack.c.bf16 %v120, %v119
    %v135 = vld [vmem:[#allocation5] sm:$0xf]
    %v136 = vld [vmem:[#allocation5 + $0x4] sm:$0xf]
    %v137 = vld [vmem:[#allocation5 + $0x8] sm:$0xf]
    %v138 = vld [vmem:[#allocation5 + $0xc] sm:$0xf]
    %v139 = vld [vmem:[#allocation5 + $0x10] sm:$0xf]
    %v140 = vld [vmem:[#allocation5 + $0x14] sm:$0xf]
    %v141 = vld [vmem:[#allocation5 + $0x18] sm:$0xf]
    %v142 = vld [vmem:[#allocation5 + $0x1c] sm:$0xf]
    %v143 = vld [vmem:[#allocation5 + $0x20] sm:$0xf]
    %v144 = vld [vmem:[#allocation5 + $0x24] sm:$0xf]
    %v145 = vld [vmem:[#allocation5 + $0x28] sm:$0xf]
    %v146 = vld [vmem:[#allocation5 + $0x2c] sm:$0xf]
    %v147 = vld [vmem:[#allocation5 + $0x30] sm:$0xf]
    %v148 = vld [vmem:[#allocation5 + $0x34] sm:$0xf]
    %v149 = vld [vmem:[#allocation5 + $0x38] sm:$0xf]
    %v150 = vld [vmem:[#allocation5 + $0x3c] sm:$0xf]
    %v151 = vld [vmem:[#allocation5 + $0x40] sm:$0xf]
    %v152 = vld [vmem:[#allocation5 + $0x44] sm:$0xf]
    %v153 = vld [vmem:[#allocation5 + $0x48] sm:$0xf]
    %v154 = vld [vmem:[#allocation5 + $0x4c] sm:$0xf]
    %v155 = vld [vmem:[#allocation5 + $0x50] sm:$0xf]
    %v156 = vld [vmem:[#allocation5 + $0x54] sm:$0xf]
    %v157 = vld [vmem:[#allocation5 + $0x58] sm:$0xf]
    %v158 = vld [vmem:[#allocation5 + $0x5c] sm:$0xf]
    %v183 = vunpack.c.l.b16 %v135
    %v184 = vunpack.c.l.b16 %v136
    %v185 = vunpack.c.l.b16 %v137
    %v186 = vunpack.c.l.b16 %v138
    %v187 = vunpack.c.l.b16 %v139
    %v188 = vunpack.c.l.b16 %v140
    %v189 = vunpack.c.l.b16 %v141
    %v190 = vunpack.c.l.b16 %v142
    %v191 = vunpack.c.l.b16 %v143
    %v192 = vunpack.c.l.b16 %v144
    %v193 = vunpack.c.l.b16 %v145
    %v194 = vunpack.c.l.b16 %v146
    %v195 = vunpack.c.l.b16 %v147
    %v196 = vunpack.c.l.b16 %v148
    %v197 = vunpack.c.l.b16 %v149
    %v198 = vunpack.c.l.b16 %v150
    %v199 = vunpack.c.l.b16 %v151
    %v200 = vunpack.c.l.b16 %v152
    %v201 = vunpack.c.l.b16 %v153
    %v202 = vunpack.c.l.b16 %v154
    %v203 = vunpack.c.l.b16 %v155
    %v204 = vunpack.c.l.b16 %v156
    %v205 = vunpack.c.l.b16 %v157
    %v206 = vunpack.c.l.b16 %v158
    %v207 = vpack.c.b16 %v184, %v183
    %v208 = vpack.c.b16 %v186, %v185
    %v209 = vpack.c.b16 %v188, %v187
    %v210 = vpack.c.b16 %v190, %v189
    %v211 = vpack.c.b16 %v192, %v191
    %v212 = vpack.c.b16 %v194, %v193
    %v213 = vpack.c.b16 %v196, %v195
    %v214 = vpack.c.b16 %v198, %v197
    %v215 = vpack.c.b16 %v200, %v199
    %v216 = vpack.c.b16 %v202, %v201
    %v217 = vpack.c.b16 %v204, %v203
    %v218 = vpack.c.b16 %v206, %v205
    %v232 = vsel %vm110, %v132, 0
    %v235 = vsel %vm110, %v134, 0
    %237 = vmatprep.subr.bf16.mxu0 0
    %238 = vmatpush1.bf16.msra.mxu0 %v207
    %239 = vmatprep.subr.bf16.mxu0 0
    %240 = vmatpush1.bf16.msra.mxu0 %v208
    %241 = vmatprep.subr.bf16.mxu0 0
    %242 = vmatpush1.bf16.msra.mxu0 %v209
    %243 = vmatprep.subr.bf16.mxu0 0
    %244 = vmatpush1.bf16.msra.mxu0 %v210
    %245 = vmatprep.subr.bf16.mxu0 0
    %246 = vmatpush1.bf16.msra.mxu0 %v211
    %247 = vmatprep.subr.bf16.mxu0 0
    %248 = vmatpush1.bf16.msra.mxu0 %v212
    %249 = vmatprep.subr.bf16.mxu0 0
    %250 = vmatpush1.bf16.msra.mxu0 %v213
    %251 = vmatprep.subr.bf16.mxu0 0
    %252 = vmatpush1.bf16.msra.mxu0 %v214
    %253 = vmatprep.subr.bf16.mxu0 0
    %254 = vmatpush1.bf16.msra.mxu0 %v215
    %255 = vmatprep.subr.bf16.mxu0 0
    %256 = vmatpush1.bf16.msra.mxu0 %v216
    %257 = vmatprep.subr.bf16.mxu0 0
    %258 = vmatpush1.bf16.msra.mxu0 %v217
    %259 = vmatprep.subr.bf16.mxu0 0
    %260 = vmatpush1.bf16.msra.mxu0 %v218
    %261 = vmatprep.subr.bf16.mxu0 0
    %262 = vmatpush1.bf16.msra.mxu0 0
    %263 = vmatprep.subr.bf16.mxu0 0
    %264 = vmatpush1.bf16.msra.mxu0 0
    %265 = vmatprep.subr.bf16.mxu0 0
    %266 = vmatpush1.bf16.msra.mxu0 0
    %267 = vmatprep.subr.bf16.mxu0 0
    %268 = vmatpush1.bf16.msra.mxu0 0
    %269 = vmatprep.mubr.bf16.mxu0 %v232
    %270 = vmatmul.mubr.bf16.gmra.mrb[0].mxu0 %v131
    %v271 = vpop.f32.mrb[0].mxu0
    %v272 = vadd.f32 0.0, %v271
    %v273 = vpop.f32.mrb[0].mxu0
    %v274 = vpop.f32.mrb[0].mxu0
    %v275 = vadd.f32 0.0, %v274
    %v276 = vpop.f32.mrb[0].mxu0
    %277 = vmatprep.mubr.bf16.mxu0 %v235
    %278 = vmatmul.mubr.bf16.gmra.mrb[0].mxu0 %v133
    %v279 = vpop.f32.mrb[0].mxu0
    %v280 = vadd.f32 0.0, %v279
    %v281 = vpop.f32.mrb[0].mxu0
    %v282 = vpop.f32.mrb[0].mxu0
    %v283 = vadd.f32 0.0, %v282
    %v284 = vpop.f32.mrb[0].mxu0
    %285 = vdwg.mxu0
    %v286 = vadd.f32 %v272, %v275
    %v287 = vadd.f32 %v286, %v280
    %v288 = vadd.f32 %v287, %v283
    %v289 = vrot.slane %v288, 4
    %v290 = vadd.f32 %v288, %v289
    %v291 = vrot.slane %v290, 2
    %v292 = vadd.f32 %v290, %v291
    %v293 = vrot.slane %v292, 1
    %v294 = vadd.f32 %v292, %v293
    %v295 = vmul.f32 %v272, %v272
    %v296 = vmul.f32 %v275, %v275
    %v297 = vmul.f32 %v280, %v280
    %v298 = vmul.f32 %v283, %v283
    %v299 = vadd.f32 %v295, %v296
    %v300 = vadd.f32 %v299, %v297
    %v301 = vadd.f32 %v300, %v298
    %v302 = vrot.slane %v301, 4
    %v303 = vadd.f32 %v301, %v302
    %v304 = vrot.slane %v303, 2
    %v305 = vadd.f32 %v303, %v304
    %v306 = vrot.slane %v305, 1
    %v307 = vadd.f32 %v305, %v306
    %vm308 = vcmask 1040384
    %v309 = vsel %vm308, %v294, %v307
    %v310 = vld [vmem:[#allocation8] sm:$0xff]
    %v311 = vld [vmem:[#allocation8 + $0x8] sm:$0xff]
    %v312 = vld [vmem:[#allocation8 + $0x10] sm:$0xff]
    %v313 = vld [vmem:[#allocation8 + $0x18] sm:$0xff]
    %v314 = vld [vmem:[#allocation8 + $0x20] sm:$0xff]
    %v315 = vld [vmem:[#allocation8 + $0x28] sm:$0xff]
    %v316 = vld [vmem:[#allocation8 + $0x30] sm:$0xff]
    %v317 = vld [vmem:[#allocation8 + $0x38] sm:$0xff]
    %v318 = vld [vmem:[#allocation8 + $0x40] sm:$0xff]
    %v319 = vld [vmem:[#allocation8 + $0x48] sm:$0xff]
    %v320 = vld [vmem:[#allocation8 + $0x50] sm:$0xff]
    %v321 = vld [vmem:[#allocation8 + $0x58] sm:$0xff]
    %v322 = vld [vmem:[#allocation8 + $0x60] sm:$0xff]
    %v323 = vld [vmem:[#allocation8 + $0x68] sm:$0xff]
    %v324 = vld [vmem:[#allocation8 + $0x70] sm:$0xff]
    %v325 = vld [vmem:[#allocation8 + $0x78] sm:$0xff]
    %326 = vmatprep.subr.mxu0 0.0
    %327 = vmatpush1.msra.mxu0 %v310
    %328 = vmatprep.subr.mxu0 0.0
    %329 = vmatpush1.msra.mxu0 %v311
    %330 = vmatprep.subr.mxu0 0.0
    %331 = vmatpush1.msra.mxu0 %v312
    %332 = vmatprep.subr.mxu0 0.0
    %333 = vmatpush1.msra.mxu0 %v313
    %334 = vmatprep.subr.mxu0 0.0
    %335 = vmatpush1.msra.mxu0 %v314
    %336 = vmatprep.subr.mxu0 0.0
    %337 = vmatpush1.msra.mxu0 %v315
    %338 = vmatprep.subr.mxu0 0.0
    %339 = vmatpush1.msra.mxu0 %v316
    %340 = vmatprep.subr.mxu0 0.0
    %341 = vmatpush1.msra.mxu0 %v317
    %342 = vmatprep.subr.mxu0 0.0
    %343 = vmatpush1.msra.mxu0 %v318
    %344 = vmatprep.subr.mxu0 0.0
    %345 = vmatpush1.msra.mxu0 %v319
    %346 = vmatprep.subr.mxu0 0.0
    %347 = vmatpush1.msra.mxu0 %v320
    %348 = vmatprep.subr.mxu0 0.0
    %349 = vmatpush1.msra.mxu0 %v321
    %350 = vmatprep.subr.mxu0 0.0
    %351 = vmatpush1.msra.mxu0 %v322
    %352 = vmatprep.subr.mxu0 0.0
    %353 = vmatpush1.msra.mxu0 %v323
    %354 = vmatprep.subr.mxu0 0.0
    %355 = vmatpush1.msra.mxu0 %v324
    %356 = vmatprep.subr.mxu0 0.0
    %357 = vmatpush1.msra.mxu0 %v325
    %358 = vmatprep.subr.mxu0 0.0
    %359 = vmatpush1.msra.mxu0 0.0
    %360 = vmatprep.subr.mxu0 0.0
    %361 = vmatpush1.msra.mxu0 0.0
    %362 = vmatprep.subr.mxu0 0.0
    %363 = vmatpush1.msra.mxu0 0.0
    %364 = vmatprep.subr.mxu0 0.0
    %365 = vmatpush1.msra.mxu0 0.0
    %366 = vmatprep.subr.mxu0 0.0
    %367 = vmatpush1.msra.mxu0 0.0
    %368 = vmatprep.subr.mxu0 0.0
    %369 = vmatpush1.msra.mxu0 0.0
    %370 = vmatprep.subr.mxu0 0.0
    %371 = vmatpush1.msra.mxu0 0.0
    %372 = vmatprep.subr.mxu0 0.0
    %373 = vmatpush1.msra.mxu0 0.0
    %374 = vmatprep.subr.mxu0 0.0
    %375 = vmatpush1.msra.mxu0 0.0
    %376 = vmatprep.subr.mxu0 0.0
    %377 = vmatpush1.msra.mxu0 0.0
    %378 = vmatprep.subr.mxu0 0.0
    %379 = vmatpush1.msra.mxu0 0.0
    %380 = vmatprep.subr.mxu0 0.0
    %381 = vmatpush1.msra.mxu0 0.0
    %382 = vmatprep.subr.mxu0 0.0
    %383 = vmatpush1.msra.mxu0 0.0
    %384 = vmatprep.subr.mxu0 0.0
    %385 = vmatpush1.msra.mxu0 0.0
    %386 = vmatprep.subr.mxu0 0.0
    %387 = vmatpush1.msra.mxu0 0.0
    %388 = vmatprep.subr.mxu0 0.0
    %389 = vmatpush1.msra.mxu0 0.0
    %390 = vmatprep.mubr.f32.mxu0 0.0
    %391 = vmatmul.mubr.f32.gmra.mrb[0].mxu0 %v309
    %v392 = vpop.f32.mrb[0].mxu0
    %v393 = vadd.f32 0.0, %v392
    %v394 = vpop.f32.mrb[0].mxu0
    %395 = vdwg.mxu0
    %v396 = vmul.f32 %v393, %v393
    %v398 = vrot.slane %v396, 7
    %v400 = vsub.f32 %v393, %v398
    %v401 = vadd.f32 %v400, 1e-05
    %v402 = vrsqrt.pop %v401
    %v403 = vld [vmem:[%s4] sm:$0x1]
    %v405 = vlaneseq
    %v406 = vshrl.u32 %v405, 7
    %v407 = vsub.s32 0, %v406
    %v408 = vrot.slane %v403, %v407
    %v410 = vmul.f32 %v402, %v408
    %v411 = vlaneseq
    %v412 = vshrl.u32 %v411, 7
    %v413 = vsub.s32 0, %v412
    %v414 = vrot.slane %v393, %v413
    %v415 = vsub.f32 %v272, %v414
    %v416 = vsub.f32 %v275, %v414
    %v417 = vsub.f32 %v280, %v414
    %v418 = vsub.f32 %v283, %v414
    %v419 = vlaneseq
    %v420 = vshrl.u32 %v419, 7
    %v421 = vsub.s32 1, %v420
    %v422 = vrot.slane %v410, %v421
    %v423 = vmul.f32 %v415, %v422
    %v424 = vmul.f32 %v416, %v422
    %v425 = vmul.f32 %v417, %v422
    %v426 = vmul.f32 %v418, %v422
    %v427 = vld [vmem:[%s5] sm:$0x1]
    %v429 = vlaneseq
    %v430 = vshrl.u32 %v429, 7
    %v431 = vsub.s32 0, %v430
    %v432 = vrot.slane %v427, %v431
    %v434 = vadd.f32 %v423, %v432
    %v435 = vadd.f32 %v424, %v432
    %v436 = vadd.f32 %v425, %v432
    %v437 = vadd.f32 %v426, %v432
    %v438 = vmax.f32 %v434, 0.0
    %v439 = vmax.f32 %v435, 0.0
    %v440 = vmax.f32 %v436, 0.0
    %v441 = vmax.f32 %v437, 0.0
    %v442 = vrot.slane %v438, 7
    %v443 = vrot.slane %v439, 7
    %v444 = vsel %vm94, %v442, %v443
    %v445 = vsel %vm94, %v443, %v442
    %v446 = vrot.slane %v438, 1
    %v447 = vrot.slane %v439, 1
    %v448 = vsel %vm99, %v446, %v447
    %v449 = vsel %vm99, %v447, %v446
    %v450 = vrot.slane %v440, 7
    %v451 = vrot.slane %v441, 7
    %v452 = vsel %vm94, %v450, %v451
    %v453 = vsel %vm94, %v451, %v450
    %v454 = vrot.slane %v440, 1
    %v455 = vrot.slane %v441, 1
    %v456 = vsel %vm99, %v454, %v455
    %v457 = vsel %vm99, %v455, %v454
    %v458 = vpack.c.bf16 %v444, %v445
    %v459 = vpack.c.bf16 %v439, %v438
    %v460 = vpack.c.bf16 %v449, %v448
    %v461 = vpack.c.bf16 %v452, %v453
    %v462 = vpack.c.bf16 %v441, %v440
    %v463 = vpack.c.bf16 %v457, %v456
    %v464 = vld [vmem:[#allocation7] sm:$0xf]
    %v465 = vld [vmem:[#allocation7 + $0x4] sm:$0xf]
    %v466 = vld [vmem:[#allocation7 + $0x8] sm:$0xf]
    %v467 = vld [vmem:[#allocation7 + $0xc] sm:$0xf]
    %v468 = vld [vmem:[#allocation7 + $0x10] sm:$0xf]
    %v469 = vld [vmem:[#allocation7 + $0x14] sm:$0xf]
    %v470 = vld [vmem:[#allocation7 + $0x18] sm:$0xf]
    %v471 = vld [vmem:[#allocation7 + $0x1c] sm:$0xf]
    %v472 = vld [vmem:[#allocation7 + $0x20] sm:$0xf]
    %v473 = vld [vmem:[#allocation7 + $0x24] sm:$0xf]
    %v474 = vld [vmem:[#allocation7 + $0x28] sm:$0xf]
    %v475 = vld [vmem:[#allocation7 + $0x2c] sm:$0xf]
    %v476 = vld [vmem:[#allocation7 + $0x30] sm:$0xf]
    %v477 = vld [vmem:[#allocation7 + $0x34] sm:$0xf]
    %v478 = vld [vmem:[#allocation7 + $0x38] sm:$0xf]
    %v479 = vld [vmem:[#allocation7 + $0x3c] sm:$0xf]
    %v480 = vld [vmem:[#allocation7 + $0x40] sm:$0xf]
    %v481 = vld [vmem:[#allocation7 + $0x44] sm:$0xf]
    %v482 = vld [vmem:[#allocation7 + $0x48] sm:$0xf]
    %v483 = vld [vmem:[#allocation7 + $0x4c] sm:$0xf]
    %v484 = vld [vmem:[#allocation7 + $0x50] sm:$0xf]
    %v485 = vld [vmem:[#allocation7 + $0x54] sm:$0xf]
    %v486 = vld [vmem:[#allocation7 + $0x58] sm:$0xf]
    %v487 = vld [vmem:[#allocation7 + $0x5c] sm:$0xf]
    %v488 = vld [vmem:[#allocation7 + $0x60] sm:$0xf]
    %v489 = vld [vmem:[#allocation7 + $0x64] sm:$0xf]
    %v490 = vld [vmem:[#allocation7 + $0x68] sm:$0xf]
    %v491 = vld [vmem:[#allocation7 + $0x6c] sm:$0xf]
    %v492 = vld [vmem:[#allocation7 + $0x70] sm:$0xf]
    %v493 = vld [vmem:[#allocation7 + $0x74] sm:$0xf]
    %v494 = vld [vmem:[#allocation7 + $0x78] sm:$0xf]
    %v495 = vld [vmem:[#allocation7 + $0x7c] sm:$0xf]
    %v496 = vld [vmem:[#allocation7 + $0x80] sm:$0xf]
    %v497 = vld [vmem:[#allocation7 + $0x84] sm:$0xf]
    %v498 = vld [vmem:[#allocation7 + $0x88] sm:$0xf]
    %v499 = vld [vmem:[#allocation7 + $0x8c] sm:$0xf]
    %v500 = vld [vmem:[#allocation7 + $0x90] sm:$0xf]
    %v501 = vld [vmem:[#allocation7 + $0x94] sm:$0xf]
    %v502 = vld [vmem:[#allocation7 + $0x98] sm:$0xf]
    %v503 = vld [vmem:[#allocation7 + $0x9c] sm:$0xf]
    %v504 = vld [vmem:[#allocation7 + $0xa0] sm:$0xf]
    %v505 = vld [vmem:[#allocation7 + $0xa4] sm:$0xf]
    %v506 = vld [vmem:[#allocation7 + $0xa8] sm:$0xf]
    %v507 = vld [vmem:[#allocation7 + $0xac] sm:$0xf]
    %v508 = vld [vmem:[#allocation7 + $0xb0] sm:$0xf]
    %v509 = vld [vmem:[#allocation7 + $0xb4] sm:$0xf]
    %v510 = vld [vmem:[#allocation7 + $0xb8] sm:$0xf]
    %v511 = vld [vmem:[#allocation7 + $0xbc] sm:$0xf]
    %v560 = vunpack.c.l.b16 %v464
    %v561 = vunpack.c.l.b16 %v465
    %v562 = vunpack.c.l.b16 %v466
    %v563 = vunpack.c.l.b16 %v467
    %v564 = vunpack.c.l.b16 %v468
    %v565 = vunpack.c.l.b16 %v469
    %v566 = vunpack.c.l.b16 %v470
    %v567 = vunpack.c.l.b16 %v471
    %v568 = vunpack.c.l.b16 %v472
    %v569 = vunpack.c.l.b16 %v473
    %v570 = vunpack.c.l.b16 %v474
    %v571 = vunpack.c.l.b16 %v475
    %v572 = vunpack.c.l.b16 %v476
    %v573 = vunpack.c.l.b16 %v477
    %v574 = vunpack.c.l.b16 %v478
    %v575 = vunpack.c.l.b16 %v479
    %v576 = vunpack.c.l.b16 %v480
    %v577 = vunpack.c.l.b16 %v481
    %v578 = vunpack.c.l.b16 %v482
    %v579 = vunpack.c.l.b16 %v483
    %v580 = vunpack.c.l.b16 %v484
    %v581 = vunpack.c.l.b16 %v485
    %v582 = vunpack.c.l.b16 %v486
    %v583 = vunpack.c.l.b16 %v487
    %v584 = vunpack.c.l.b16 %v488
    %v585 = vunpack.c.l.b16 %v489
    %v586 = vunpack.c.l.b16 %v490
    %v587 = vunpack.c.l.b16 %v491
    %v588 = vunpack.c.l.b16 %v492
    %v589 = vunpack.c.l.b16 %v493
    %v590 = vunpack.c.l.b16 %v494
    %v591 = vunpack.c.l.b16 %v495
    %v592 = vunpack.c.l.b16 %v496
    %v593 = vunpack.c.l.b16 %v497
    %v594 = vunpack.c.l.b16 %v498
    %v595 = vunpack.c.l.b16 %v499
    %v596 = vunpack.c.l.b16 %v500
    %v597 = vunpack.c.l.b16 %v501
    %v598 = vunpack.c.l.b16 %v502
    %v599 = vunpack.c.l.b16 %v503
    %v600 = vunpack.c.l.b16 %v504
    %v601 = vunpack.c.l.b16 %v505
    %v602 = vunpack.c.l.b16 %v506
    %v603 = vunpack.c.l.b16 %v507
    %v604 = vunpack.c.l.b16 %v508
    %v605 = vunpack.c.l.b16 %v509
    %v606 = vunpack.c.l.b16 %v510
    %v607 = vunpack.c.l.b16 %v511
    %v608 = vpack.c.b16 %v561, %v560
    %v609 = vpack.c.b16 %v563, %v562
    %v610 = vpack.c.b16 %v565, %v564
    %v611 = vpack.c.b16 %v567, %v566
    %v612 = vpack.c.b16 %v569, %v568
    %v613 = vpack.c.b16 %v571, %v570
    %v614 = vpack.c.b16 %v573, %v572
    %v615 = vpack.c.b16 %v575, %v574
    %v616 = vpack.c.b16 %v577, %v576
    %v617 = vpack.c.b16 %v579, %v578
    %v618 = vpack.c.b16 %v581, %v580
    %v619 = vpack.c.b16 %v583, %v582
    %v620 = vpack.c.b16 %v585, %v584
    %v621 = vpack.c.b16 %v587, %v586
    %v622 = vpack.c.b16 %v589, %v588
    %v623 = vpack.c.b16 %v591, %v590
    %v624 = vpack.c.b16 %v593, %v592
    %v625 = vpack.c.b16 %v595, %v594
    %v626 = vpack.c.b16 %v597, %v596
    %v627 = vpack.c.b16 %v599, %v598
    %v628 = vpack.c.b16 %v601, %v600
    %v629 = vpack.c.b16 %v603, %v602
    %v630 = vpack.c.b16 %v605, %v604
    %v631 = vpack.c.b16 %v607, %v606
    %656 = vmatprep.subr.bf16.mxu0 0
    %657 = vmatpush1.bf16.msra.mxu0 %v608
    %658 = vmatprep.subr.bf16.mxu0 0
    %659 = vmatpush1.bf16.msra.mxu0 %v609
    %660 = vmatprep.subr.bf16.mxu0 0
    %661 = vmatpush1.bf16.msra.mxu0 %v610
    %662 = vmatprep.subr.bf16.mxu0 0
    %663 = vmatpush1.bf16.msra.mxu0 %v611
    %664 = vmatprep.subr.bf16.mxu0 0
    %665 = vmatpush1.bf16.msra.mxu0 %v612
    %666 = vmatprep.subr.bf16.mxu0 0
    %667 = vmatpush1.bf16.msra.mxu0 %v613
    %668 = vmatprep.subr.bf16.mxu0 0
    %669 = vmatpush1.bf16.msra.mxu0 %v614
    %670 = vmatprep.subr.bf16.mxu0 0
    %671 = vmatpush1.bf16.msra.mxu0 %v615
    %672 = vmatprep.subr.bf16.mxu0 0
    %673 = vmatpush1.bf16.msra.mxu0 %v616
    %674 = vmatprep.subr.bf16.mxu0 0
    %675 = vmatpush1.bf16.msra.mxu0 %v617
    %676 = vmatprep.subr.bf16.mxu0 0
    %677 = vmatpush1.bf16.msra.mxu0 %v618
    %678 = vmatprep.subr.bf16.mxu0 0
    %679 = vmatpush1.bf16.msra.mxu0 %v619
    %680 = vmatprep.subr.bf16.mxu0 0
    %681 = vmatpush1.bf16.msra.mxu0 %v620
    %682 = vmatprep.subr.bf16.mxu0 0
    %683 = vmatpush1.bf16.msra.mxu0 %v621
    %684 = vmatprep.subr.bf16.mxu0 0
    %685 = vmatpush1.bf16.msra.mxu0 %v622
    %686 = vmatprep.subr.bf16.mxu0 0
    %687 = vmatpush1.bf16.msra.mxu0 %v623
    %688 = vmatprep.mubr.bf16.mxu0 %v459
    %689 = vmatmul.mubr.bf16.gmra.mrb[0].mxu0 %v458
    %v690 = vpop.f32.mrb[0].mxu0
    %v691 = vadd.f32 0.0, %v690
    %v692 = vpop.f32.mrb[0].mxu0
    %v693 = vpop.f32.mrb[0].mxu0
    %v694 = vadd.f32 0.0, %v693
    %v695 = vpop.f32.mrb[0].mxu0
    %696 = vmatprep.mubr.bf16.mxu0 %v462
    %697 = vmatmul.mubr.bf16.gmra.mrb[0].mxu0 %v461
    %v698 = vpop.f32.mrb[0].mxu0
    %v699 = vadd.f32 0.0, %v698
    %v700 = vpop.f32.mrb[0].mxu0
    %v701 = vpop.f32.mrb[0].mxu0
    %v702 = vadd.f32 0.0, %v701
    %v703 = vpop.f32.mrb[0].mxu0
    %704 = vdwg.mxu0
    %705 = vmatprep.subr.bf16.mxu0 0
    %706 = vmatpush1.bf16.msra.mxu0 %v624
    %707 = vmatprep.subr.bf16.mxu0 0
    %708 = vmatpush1.bf16.msra.mxu0 %v625
    %709 = vmatprep.subr.bf16.mxu0 0
    %710 = vmatpush1.bf16.msra.mxu0 %v626
    %711 = vmatprep.subr.bf16.mxu0 0
    %712 = vmatpush1.bf16.msra.mxu0 %v627
    %713 = vmatprep.subr.bf16.mxu0 0
    %714 = vmatpush1.bf16.msra.mxu0 %v628
    %715 = vmatprep.subr.bf16.mxu0 0
    %716 = vmatpush1.bf16.msra.mxu0 %v629
    %717 = vmatprep.subr.bf16.mxu0 0
    %718 = vmatpush1.bf16.msra.mxu0 %v630
    %719 = vmatprep.subr.bf16.mxu0 0
    %720 = vmatpush1.bf16.msra.mxu0 %v631
    %721 = vmatprep.subr.bf16.mxu0 0
    %722 = vmatpush1.bf16.msra.mxu0 0
    %723 = vmatprep.subr.bf16.mxu0 0
    %724 = vmatpush1.bf16.msra.mxu0 0
    %725 = vmatprep.subr.bf16.mxu0 0
    %726 = vmatpush1.bf16.msra.mxu0 0
    %727 = vmatprep.subr.bf16.mxu0 0
    %728 = vmatpush1.bf16.msra.mxu0 0
    %729 = vmatprep.subr.bf16.mxu0 0
    %730 = vmatpush1.bf16.msra.mxu0 0
    %731 = vmatprep.subr.bf16.mxu0 0
    %732 = vmatpush1.bf16.msra.mxu0 0
    %733 = vmatprep.subr.bf16.mxu0 0
    %734 = vmatpush1.bf16.msra.mxu0 0
    %735 = vmatprep.subr.bf16.mxu0 0
    %736 = vmatpush1.bf16.msra.mxu0 0
    %737 = vmatprep.mubr.bf16.mxu0 0
    %738 = vmatmul.mubr.bf16.gmra.mrb[0].mxu0 %v460
    %v739 = vpop.f32.mrb[0].mxu0
    %v740 = vadd.f32 %v691, %v739
    %v741 = vpop.f32.mrb[0].mxu0
    %v742 = vpop.f32.mrb[0].mxu0
    %v743 = vadd.f32 %v694, %v742
    %v744 = vpop.f32.mrb[0].mxu0
    %745 = vmatprep.mubr.bf16.mxu0 0
    %746 = vmatmul.mubr.bf16.gmra.mrb[0].mxu0 %v463
    %v747 = vpop.f32.mrb[0].mxu0
    %v748 = vadd.f32 %v699, %v747
    %v749 = vpop.f32.mrb[0].mxu0
    %v750 = vpop.f32.mrb[0].mxu0
    %v751 = vadd.f32 %v702, %v750
    %v752 = vpop.f32.mrb[0].mxu0
    %753 = vdwg.mxu0
    %v754 = vadd.f32 %v740, %v743
    %v755 = vadd.f32 %v754, %v748
    %v756 = vadd.f32 %v755, %v751
    %v757 = vrot.slane %v756, 4
    %v758 = vadd.f32 %v756, %v757
    %v759 = vrot.slane %v758, 2
    %v760 = vadd.f32 %v758, %v759
    %v761 = vrot.slane %v760, 1
    %v762 = vadd.f32 %v760, %v761
    %v763 = vmul.f32 %v740, %v740
    %v764 = vmul.f32 %v743, %v743
    %v765 = vmul.f32 %v748, %v748
    %v766 = vmul.f32 %v751, %v751
    %v767 = vadd.f32 %v763, %v764
    %v768 = vadd.f32 %v767, %v765
    %v769 = vadd.f32 %v768, %v766
    %v770 = vrot.slane %v769, 4
    %v771 = vadd.f32 %v769, %v770
    %v772 = vrot.slane %v771, 2
    %v773 = vadd.f32 %v771, %v772
    %v774 = vrot.slane %v773, 1
    %v775 = vadd.f32 %v773, %v774
    %v776 = vsel %vm308, %v762, %v775
    %777 = vmatprep.subr.mxu0 0.0
    %778 = vmatpush1.msra.mxu0 %v310
    %779 = vmatprep.subr.mxu0 0.0
    %780 = vmatpush1.msra.mxu0 %v311
    %781 = vmatprep.subr.mxu0 0.0
    %782 = vmatpush1.msra.mxu0 %v312
    %783 = vmatprep.subr.mxu0 0.0
    %784 = vmatpush1.msra.mxu0 %v313
    %785 = vmatprep.subr.mxu0 0.0
    %786 = vmatpush1.msra.mxu0 %v314
    %787 = vmatprep.subr.mxu0 0.0
    %788 = vmatpush1.msra.mxu0 %v315
    %789 = vmatprep.subr.mxu0 0.0
    %790 = vmatpush1.msra.mxu0 %v316
    %791 = vmatprep.subr.mxu0 0.0
    %792 = vmatpush1.msra.mxu0 %v317
    %793 = vmatprep.subr.mxu0 0.0
    %794 = vmatpush1.msra.mxu0 %v318
    %795 = vmatprep.subr.mxu0 0.0
    %796 = vmatpush1.msra.mxu0 %v319
    %797 = vmatprep.subr.mxu0 0.0
    %798 = vmatpush1.msra.mxu0 %v320
    %799 = vmatprep.subr.mxu0 0.0
    %800 = vmatpush1.msra.mxu0 %v321
    %801 = vmatprep.subr.mxu0 0.0
    %802 = vmatpush1.msra.mxu0 %v322
    %803 = vmatprep.subr.mxu0 0.0
    %804 = vmatpush1.msra.mxu0 %v323
    %805 = vmatprep.subr.mxu0 0.0
    %806 = vmatpush1.msra.mxu0 %v324
    %807 = vmatprep.subr.mxu0 0.0
    %808 = vmatpush1.msra.mxu0 %v325
    %809 = vmatprep.subr.mxu0 0.0
    %810 = vmatpush1.msra.mxu0 0.0
    %811 = vmatprep.subr.mxu0 0.0
    %812 = vmatpush1.msra.mxu0 0.0
    %813 = vmatprep.subr.mxu0 0.0
    %814 = vmatpush1.msra.mxu0 0.0
    %815 = vmatprep.subr.mxu0 0.0
    %816 = vmatpush1.msra.mxu0 0.0
    %817 = vmatprep.subr.mxu0 0.0
    %818 = vmatpush1.msra.mxu0 0.0
    %819 = vmatprep.subr.mxu0 0.0
    %820 = vmatpush1.msra.mxu0 0.0
    %821 = vmatprep.subr.mxu0 0.0
    %822 = vmatpush1.msra.mxu0 0.0
    %823 = vmatprep.subr.mxu0 0.0
    %824 = vmatpush1.msra.mxu0 0.0
    %825 = vmatprep.subr.mxu0 0.0
    %826 = vmatpush1.msra.mxu0 0.0
    %827 = vmatprep.subr.mxu0 0.0
    %828 = vmatpush1.msra.mxu0 0.0
    %829 = vmatprep.subr.mxu0 0.0
    %830 = vmatpush1.msra.mxu0 0.0
    %831 = vmatprep.subr.mxu0 0.0
    %832 = vmatpush1.msra.mxu0 0.0
    %833 = vmatprep.subr.mxu0 0.0
    %834 = vmatpush1.msra.mxu0 0.0
    %835 = vmatprep.subr.mxu0 0.0
    %836 = vmatpush1.msra.mxu0 0.0
    %837 = vmatprep.subr.mxu0 0.0
    %838 = vmatpush1.msra.mxu0 0.0
    %839 = vmatprep.subr.mxu0 0.0
    %840 = vmatpush1.msra.mxu0 0.0
    %841 = vmatprep.mubr.f32.mxu0 0.0
    %842 = vmatmul.mubr.f32.gmra.mrb[0].mxu0 %v776
    %v843 = vpop.f32.mrb[0].mxu0
    %v844 = vadd.f32 0.0, %v843
    %v845 = vpop.f32.mrb[0].mxu0
    %846 = vdwg.mxu0
    %v847 = vmul.f32 %v844, %v844
    %v849 = vrot.slane %v847, 7
    %v851 = vsub.f32 %v844, %v849
    %v852 = vadd.f32 %v851, 1e-05
    %v853 = vrsqrt.pop %v852
    %v854 = vld [vmem:[%s6] sm:$0x1]
    %v856 = vlaneseq
    %v857 = vshrl.u32 %v856, 7
    %v858 = vsub.s32 0, %v857
    %v859 = vrot.slane %v854, %v858
    %v861 = vmul.f32 %v853, %v859
    %v862 = vlaneseq
    %v863 = vshrl.u32 %v862, 7
    %v864 = vsub.s32 0, %v863
    %v865 = vrot.slane %v844, %v864
    %v866 = vsub.f32 %v740, %v865
    %v867 = vsub.f32 %v743, %v865
    %v868 = vsub.f32 %v748, %v865
    %v869 = vsub.f32 %v751, %v865
    %v870 = vlaneseq
    %v871 = vshrl.u32 %v870, 7
    %v872 = vsub.s32 1, %v871
    %v873 = vrot.slane %v861, %v872
    %v874 = vmul.f32 %v866, %v873
    %v875 = vmul.f32 %v867, %v873
    %v876 = vmul.f32 %v868, %v873
    %v877 = vmul.f32 %v869, %v873
    %v878 = vld [vmem:[%s7] sm:$0x1]
    %v880 = vlaneseq
    %v881 = vshrl.u32 %v880, 7
    %v882 = vsub.s32 0, %v881
    %v883 = vrot.slane %v878, %v882
    %v885 = vadd.f32 %v874, %v883
    %v886 = vadd.f32 %v875, %v883
    %v887 = vadd.f32 %v876, %v883
    %v888 = vadd.f32 %v877, %v883
    %v889 = vmax.f32 %v885, 0.0
    %v890 = vmax.f32 %v886, 0.0
    %v891 = vmax.f32 %v887, 0.0
    %v892 = vmax.f32 %v888, 0.0
    %893 = vst [vmem:[#allocation10] sm:$0xff] %v889
    %894 = vst [vmem:[#allocation10 + $0x8] sm:$0xff] %v890
    %895 = vst [vmem:[#allocation10 + $0x10] sm:$0xff] %v891
    %896 = vst [vmem:[#allocation10 + $0x18] sm:$0xff] %v892
    // Predicated region
    $region50: #{tpu_custom_call.1} parent=1 // pred_check
      _
    $region51: #{tpu_custom_call.1} parent=1 // pred_check_branch
      %898 = sbr.rel (0) target = $region53
    $region52: #{tpu_custom_call.1} parent=1 // pred_region
      %s900 = ssub.s32 512, 512
      %901 = vsyncadd [#allocation4], %s900
      %s902 = sshll.u32 [#allocation10], 4
      %s903 = int_to_ptr.vmem [resolvable:$true] %s902
      %908 = dma.vmem_to_hbm [thread:$0]  %s903, 512, %s8, [#allocation4], 128, 128, 8
    $region53: #{tpu_custom_call.1} parent=1 // pred_fallthru
      _
    // Predicated region
    $region54: #{tpu_custom_call.1} parent=1 // pred_check
      _
    $region55: #{tpu_custom_call.1} parent=1 // pred_check_branch
      %910 = sbr.rel (0) target = $region57
    $region56: #{tpu_custom_call.1} parent=1 // pred_region
      %911 = dma.done [#allocation4], 512
    $region57: #{tpu_custom_call.1} parent=1 // pred_fallthru
      _
    %912 = vsyncpa [#allocation3], 1
    %913 = vsyncpa [#allocation6], 1
    %914 = vsyncpa [#allocation9], 1
    %915 = vsyncpa [#allocation4], 1

</llo_original>
